<compile_context>
chip_gen: v6e
topology: v6e:2x2x1
jax: 0.10.0
libtpu: 0.0.40
codegen_flags: <defaults>
</compile_context>

<pallas_src>
import math
import functools

import jax
import jax.numpy as jnp
from jax.experimental import pallas as pl
from jax.experimental.pallas import tpu as pltpu


# ---------------------------------------------------------------------------
# Cutoff helpers (n = 3): explicit multiply chain + selects, everything on VPU.
# ---------------------------------------------------------------------------
def _soft_step_n3(z):
    # (n+1) z^n - n z^(n+1) for n=3  ==  z^3 * (4 - 3 z), clamped to [0, 1].
    z3 = z * z * z
    poly = z3 * (4.0 - 3.0 * z)
    return jnp.where(z <= 0.0, 0.0, jnp.where(z >= 1.0, 1.0, poly))


def _soft_cutoff_n3(y, thr, inv_one_minus_thr):
    z = (y - thr) * inv_one_minus_thr
    return 1.0 - _soft_step_n3(z)


def _soft_square_cutoff_n3(d, thr, infinite):
    inv = 1.0 / (1.0 - thr)                       # python-float constant
    lower = _soft_cutoff_n3(1.0 - d, thr, inv)    # active for d <= 0.5
    if infinite:
        upper = _soft_cutoff_n3(d, thr, inv)      # active for d > 0.5
        return jnp.where(d <= 0.5, lower, upper)
    else:
        return jnp.where(d <= 0.5, lower, 1.0)


# ---------------------------------------------------------------------------
# Kernel
# ---------------------------------------------------------------------------
def _grbf_kernel(dist_ref, params_ref, out_ref, *,
                 offset, inv_range, cutoff_thr_ratio, soft_cutoff_flag,
                 infinite):
    # dist_ref:   (1, TILE)   samples on lanes
    # params_ref: (B, 3)      [:, 0]=mean, [:, 1]=coef(-0.5/std^2), [:, 2]=w_eff
    # out_ref:    (B, TILE)
    d = (dist_ref[...] - offset) * inv_range          # (1, TILE)

    mean = params_ref[:, 0:1]                         # (B, 1)
    coef = params_ref[:, 1:2]                         # (B, 1)
    w_eff = params_ref[:, 2:3]                        # (B, 1)

    diff = d - mean                                   # (B, TILE) broadcast
    x = w_eff * jnp.exp(coef * (diff * diff))         # single EUP exp / element

    if soft_cutoff_flag:
        cut = _soft_square_cutoff_n3(d, cutoff_thr_ratio, infinite)  # (1, TILE)
        x = x * cut

    # TODO(synk): fuse a downstream linear projection (jnp.dot(W, x) on the MXU)
    # here when a consumer exists, so the B x N activation never touches HBM.
    out_ref[...] = x.astype(out_ref.dtype)


# ---------------------------------------------------------------------------
# Tiling: round N up to a multiple of 128, split into balanced 128-aligned
# tiles, force >= 2 grid steps when possible (v7x megacore), respect a VMEM
# budget for the double-buffered blocks.
# ---------------------------------------------------------------------------
def _choose_tiling(n, tile_n, num_basis, out_itemsize, min_grid_steps=2,
                   vmem_budget_bytes=24 << 20):
    c = pl.cdiv(n, 128)                                   # 128-lane blocks
    per_block_bytes = 2 * 128 * (num_basis * out_itemsize + 4)  # dbl-buffered
    max_tile_blocks = max(1, vmem_budget_bytes // per_block_bytes)
    req_blocks = max(1, int(tile_n) // 128)
    req_blocks = min(req_blocks, max_tile_blocks)
    num_steps = max(pl.cdiv(c, req_blocks), min(min_grid_steps, c))
    tile_blocks = pl.cdiv(c, num_steps)
    tile = tile_blocks * 128
    n_pad = tile * num_steps
    return tile, num_steps, n_pad


# ---------------------------------------------------------------------------
# Wrapper
# ---------------------------------------------------------------------------
def gaussian_rbf_finite_cutoff(dist, mean, std_logit, weight_logit, *,
                               cutoff, offset=None, soft_cutoff=True,
                               cutoff_thr_ratio=0.8, infinite=False,
                               max_weight=4.0, tile_n=32768,
                               out_dtype=jnp.float32, layout="nb"):
    """dist: [N] float32.

    layout="nb" (default): returns [N, num_basis] — same semantics as the
                           PyTorch module's forward (one extra transposed HBM
                           pass done by XLA).
    layout="bn":           returns [num_basis, N] — the kernel-native,
                           lane-dense layout with no extra transpose pass
                           (preferred when the consumer can contract over the
                           basis axis directly)."""
    num_basis = mean.shape[-1]
    if offset is None:
        offset = 0.01 * cutoff
    normalizer = math.sqrt(num_basis)

    # --- fold per-basis math into coefficients (cheap (1, B) work in JAX) ---
    std = jax.nn.softplus(std_logit) + 1e-5                       # (1, B)
    coef = -0.5 / (std * std)                                     # (1, B)
    w_eff = jax.nn.sigmoid(weight_logit) * (max_weight * normalizer)
    params = jnp.stack(
        [mean.reshape(-1), coef.reshape(-1), w_eff.reshape(-1)],
        axis=-1).astype(jnp.float32)                              # (B, 3)

    # --- balanced, 128-aligned tiling with >= 2 grid steps when possible ----
    n = dist.shape[0]
    out_itemsize = jnp.dtype(out_dtype).itemsize
    tile, num_steps, n_pad = _choose_tiling(n, tile_n, num_basis, out_itemsize)
    dist_row = jnp.pad(dist.astype(jnp.float32),
                       (0, n_pad - n)).reshape(1, n_pad)

    kernel = functools.partial(
        _grbf_kernel,
        offset=float(offset),
        inv_range=float(1.0 / (cutoff - offset)),
        cutoff_thr_ratio=float(cutoff_thr_ratio),
        soft_cutoff_flag=bool(soft_cutoff),
        infinite=bool(infinite))

    # Advisory cost for XLA's scheduler.
    cost = pl.CostEstimate(
        flops=10 * num_basis * n_pad,
        transcendentals=num_basis * n_pad,
        bytes_accessed=n_pad * 4 + num_basis * 3 * 4
        + num_basis * n_pad * out_itemsize)

    # Only raise the scoped-VMEM limit when the blocks actually need it.
    needed_vmem = 2 * (num_basis * tile * out_itemsize + tile * 4) + 4096
    vmem_limit = None
    if needed_vmem > (12 << 20):
        vmem_limit = int(min(needed_vmem + (4 << 20), 28 << 20))

    out_bn = pl.pallas_call(
        kernel,
        out_shape=jax.ShapeDtypeStruct((num_basis, n_pad), out_dtype),
        grid_spec=pltpu.PrefetchScalarGridSpec(
            num_scalar_prefetch=0,
            grid=(num_steps,),
            in_specs=[
                pl.BlockSpec((1, tile), lambda i: (0, i)),
                pl.BlockSpec((num_basis, 3), lambda i: (0, 0)),
            ],
            out_specs=pl.BlockSpec((num_basis, tile), lambda i: (0, i)),
        ),
        compiler_params=pltpu.CompilerParams(
            dimension_semantics=("parallel",),     # shards across TCs on v7x
            vmem_limit_bytes=vmem_limit),
        cost_estimate=cost,
    )(dist_row, params)

    if layout == "bn":
        return out_bn[:, :n]                        # lane-dense, no transpose
    # Module semantics: (N, num_basis). (Extra XLA transpose pass; use
    # layout="bn" to avoid it when the consumer allows.)
    return out_bn[:, :n].T


# ---------------------------------------------------------------------------
# Pure-JAX reference (original PyTorch formulation, including mask-multiply
# cutoff), for correctness checking.
# ---------------------------------------------------------------------------
def _ref_soft_step(z, n=3):
    return (z > 0) * ((z < 1) * ((n + 1) * z ** n - n * z ** (n + 1)) + (z >= 1))


def _ref_soft_cutoff(y, thr=0.8, n=3):
    z = (y - thr) / (1.0 - thr)
    return 1.0 - _ref_soft_step(z, n=n)


def _ref_soft_square_cutoff(d, thr=0.8, n=3, infinite=False):
    if infinite:
        return (_ref_soft_cutoff(d, thr, n) * (d > 0.5)
                + _ref_soft_cutoff(1.0 - d, thr, n) * (d <= 0.5))
    else:
        return ((d > 0.5) + _ref_soft_cutoff(1.0 - d, thr, n) * (d <= 0.5))


def _reference(dist, mean, std_logit, weight_logit, *, cutoff, offset,
               soft_cutoff=True, cutoff_thr_ratio=0.8, infinite=False,
               max_weight=4.0):
    num_basis = mean.shape[-1]
    normalizer = math.sqrt(num_basis)
    d = (dist - offset) / (cutoff - offset)
    d = d[:, None]
    std = jax.nn.softplus(std_logit) + 1e-5
    x = jnp.exp(-0.5 * ((d - mean) / std) ** 2)
    x = jax.nn.sigmoid(weight_logit) * max_weight * x
    if soft_cutoff:
        x = x * _ref_soft_square_cutoff(d, thr=cutoff_thr_ratio, n=3,
                                        infinite=infinite)
    return x * normalizer


if __name__ == "__main__":
    num_basis = 16
    cutoff = 2.0
    offset = 0.01 * cutoff
    N = 5000          # not a multiple of 128 -> exercises balanced padding

    # Deterministic parameter init mirroring the PyTorch __init__.
    mean = jnp.linspace(0.0, 1.0, num_basis + 2)[1:-1][None, :].astype(jnp.float32)
    init_std = 2.0 / num_basis
    std_logit = jnp.full((1, num_basis), math.log(math.exp(init_std) - 1.0),
                         dtype=jnp.float32)
    max_weight = 4.0
    weight_logit = jnp.full((1, num_basis),
                            -math.log(max_weight / 1.0 - 1.0),
                            dtype=jnp.float32)

    key = jax.random.PRNGKey(0)
    dist = jax.random.uniform(key, (N,), dtype=jnp.float32,
                              minval=0.0, maxval=cutoff)

    ref = _reference(dist, mean, std_logit, weight_logit,
                     cutoff=cutoff, offset=offset, soft_cutoff=True,
                     cutoff_thr_ratio=0.8, infinite=False,
                     max_weight=max_weight)

    # 1) Default path: PyTorch semantics, f32 output (N, num_basis).
    out = gaussian_rbf_finite_cutoff(
        dist, mean, std_logit, weight_logit,
        cutoff=cutoff, offset=offset, soft_cutoff=True,
        cutoff_thr_ratio=0.8, infinite=False, max_weight=max_weight)
    out = jax.block_until_ready(out)
    assert out.shape == (N, num_basis)
    assert jnp.max(jnp.abs(out - ref)) < 1e-4, "f32 mismatch vs. reference"

    # 2) Fast path: lane-dense (num_basis, N) bf16 output, no transpose pass.
    out_bn = gaussian_rbf_finite_cutoff(
        dist, mean, std_logit, weight_logit,
        cutoff=cutoff, offset=offset, soft_cutoff=True,
        cutoff_thr_ratio=0.8, infinite=False, max_weight=max_weight,
        out_dtype=jnp.bfloat16, layout="bn")
    out_bn = jax.block_until_ready(out_bn)
    assert out_bn.shape == (num_basis, N)
    err_bf16 = jnp.max(jnp.abs(out_bn.astype(jnp.float32).T - ref))
    assert err_bf16 < 5e-2, "bf16 mismatch vs. reference"

    print("KERNEL_OK")
</pallas_src>

<mosaic_0001>
module attributes {stable_mosaic.version = 11 : i64} {
  func.func @_grbf_kernel(%arg0: i32, %arg1: memref<1x2560xf32, #tpu.memory_space<vmem>>, %arg2: memref<16x3xf32, #tpu.memory_space<vmem>>, %arg3: memref<16x2560xf32, #tpu.memory_space<vmem>>) attributes {dimension_semantics = [#tpu.dimension_semantics<parallel>], iteration_bounds = array<i64: 2>, scalar_prefetch = 0 : i64, scratch_operands = 0 : i64, tpu.core_type = #tpu.core_type<tc>, window_params = [{transform_indices = @transform_0, window_bounds = array<i64: 1, 2560>}, {pipeline_mode = #tpu.pipeline_mode<synchronous>, transform_indices = @transform_1, window_bounds = array<i64: 16, 3>}, {transform_indices = @transform_2, window_bounds = array<i64: 16, 2560>}]} {
    %c0 = arith.constant 0 : index
    %c0_0 = arith.constant 0 : index
    %0 = vector.load %arg1[%c0, %c0_0] : memref<1x2560xf32, #tpu.memory_space<vmem>>, vector<1x2560xf32>
    %cst = arith.constant 2.000000e-02 : f32
    %1 = vector.broadcast %cst : f32 to vector<1x2560xf32>
    %2 = arith.subf %0, %1 : vector<1x2560xf32>
    %cst_1 = arith.constant 0.50505048 : f32
    %3 = vector.broadcast %cst_1 : f32 to vector<1x2560xf32>
    %4 = arith.mulf %2, %3 : vector<1x2560xf32>
    %c0_2 = arith.constant 0 : index
    %c0_3 = arith.constant 0 : index
    %5 = vector.load %arg2[%c0_2, %c0_3] : memref<16x3xf32, #tpu.memory_space<vmem>>, vector<16x1xf32>
    %c0_4 = arith.constant 0 : index
    %c1 = arith.constant 1 : index
    %6 = vector.load %arg2[%c0_4, %c1] : memref<16x3xf32, #tpu.memory_space<vmem>>, vector<16x1xf32>
    %c0_5 = arith.constant 0 : index
    %c2 = arith.constant 2 : index
    %7 = vector.load %arg2[%c0_5, %c2] : memref<16x3xf32, #tpu.memory_space<vmem>>, vector<16x1xf32>
    %8 = vector.broadcast %4 : vector<1x2560xf32> to vector<16x2560xf32>
    %9 = vector.broadcast %5 : vector<16x1xf32> to vector<16x2560xf32>
    %10 = arith.subf %8, %9 : vector<16x2560xf32>
    %11 = arith.mulf %10, %10 : vector<16x2560xf32>
    %12 = vector.broadcast %6 : vector<16x1xf32> to vector<16x2560xf32>
    %13 = arith.mulf %12, %11 : vector<16x2560xf32>
    %14 = math.exp %13 : vector<16x2560xf32>
    %15 = vector.broadcast %7 : vector<16x1xf32> to vector<16x2560xf32>
    %16 = arith.mulf %15, %14 : vector<16x2560xf32>
    %cst_6 = arith.constant 1.000000e+00 : f32
    %17 = vector.broadcast %cst_6 : f32 to vector<1x2560xf32>
    %18 = arith.subf %17, %4 : vector<1x2560xf32>
    %cst_7 = arith.constant 8.000000e-01 : f32
    %19 = vector.broadcast %cst_7 : f32 to vector<1x2560xf32>
    %20 = arith.subf %18, %19 : vector<1x2560xf32>
    %cst_8 = arith.constant 5.000000e+00 : f32
    %21 = vector.broadcast %cst_8 : f32 to vector<1x2560xf32>
    %22 = arith.mulf %20, %21 : vector<1x2560xf32>
    %23 = arith.mulf %22, %22 : vector<1x2560xf32>
    %24 = arith.mulf %23, %22 : vector<1x2560xf32>
    %cst_9 = arith.constant 3.000000e+00 : f32
    %25 = vector.broadcast %cst_9 : f32 to vector<1x2560xf32>
    %26 = arith.mulf %25, %22 : vector<1x2560xf32>
    %cst_10 = arith.constant 4.000000e+00 : f32
    %27 = vector.broadcast %cst_10 : f32 to vector<1x2560xf32>
    %28 = arith.subf %27, %26 : vector<1x2560xf32>
    %29 = arith.mulf %24, %28 : vector<1x2560xf32>
    %cst_11 = arith.constant 0.000000e+00 : f32
    %30 = vector.broadcast %cst_11 : f32 to vector<1x2560xf32>
    %31 = arith.cmpf ole, %22, %30 : vector<1x2560xf32>
    %cst_12 = arith.constant 1.000000e+00 : f32
    %32 = vector.broadcast %cst_12 : f32 to vector<1x2560xf32>
    %33 = arith.cmpf oge, %22, %32 : vector<1x2560xf32>
    %cst_13 = arith.constant 1.000000e+00 : f32
    %34 = vector.broadcast %cst_13 : f32 to vector<1x2560xf32>
    %35 = arith.select %33, %34, %29 : vector<1x2560xi1>, vector<1x2560xf32>
    %cst_14 = arith.constant 0.000000e+00 : f32
    %36 = vector.broadcast %cst_14 : f32 to vector<1x2560xf32>
    %37 = arith.select %31, %36, %35 : vector<1x2560xi1>, vector<1x2560xf32>
    %cst_15 = arith.constant 1.000000e+00 : f32
    %38 = vector.broadcast %cst_15 : f32 to vector<1x2560xf32>
    %39 = arith.subf %38, %37 : vector<1x2560xf32>
    %cst_16 = arith.constant 5.000000e-01 : f32
    %40 = vector.broadcast %cst_16 : f32 to vector<1x2560xf32>
    %41 = arith.cmpf ole, %4, %40 : vector<1x2560xf32>
    %cst_17 = arith.constant 1.000000e+00 : f32
    %42 = vector.broadcast %cst_17 : f32 to vector<1x2560xf32>
    %43 = arith.select %41, %39, %42 : vector<1x2560xi1>, vector<1x2560xf32>
    %44 = vector.broadcast %43 : vector<1x2560xf32> to vector<16x2560xf32>
    %45 = arith.mulf %16, %44 : vector<16x2560xf32>
    %c0_18 = arith.constant 0 : index
    %c0_19 = arith.constant 0 : index
    %46 = vector.load %arg3[%c0_18, %c0_19] : memref<16x2560xf32, #tpu.memory_space<vmem>>, vector<16x2560xf32>
    tpu.vector_store %arg3[%c0_18, %c0_19], %45 {strides = array<i32>} : memref<16x2560xf32, #tpu.memory_space<vmem>>, vector<16x2560xf32>,
    return
  }
  func.func @transform_0(%arg0: i32) -> (i32, i32) {
    %c0_i32 = arith.constant 0 : i32
    %c0_i32_0 = arith.constant 0 : i32
    return %c0_i32, %arg0 : i32, i32
  }
  func.func @transform_1(%arg0: i32) -> (i32, i32) {
    %c0_i32 = arith.constant 0 : i32
    %c0_i32_0 = arith.constant 0 : i32
    %c0_i32_1 = arith.constant 0 : i32
    return %c0_i32, %c0_i32_0 : i32, i32
  }
  func.func @transform_2(%arg0: i32) -> (i32, i32) {
    %c0_i32 = arith.constant 0 : i32
    %c0_i32_0 = arith.constant 0 : i32
    return %c0_i32, %arg0 : i32, i32
  }
}

</mosaic_0001>

<llo_original>
// kernel: tpu_custom_call.1
$region0: #{tpu_custom_call.1}
  #allocation0 [shape = 'u32[]', space=smem, size = 0x4, offset = 0x4, fixed_abs, tag = 'smem constant byte address 0x4 - core index']
  #allocation1 [shape = 'u32[144,128]{1,0:T(1,128)}', space=vmem, size = 0x12000, scoped, tag = 'internal scratch']
  %s0 = inlined_call_operand.hbm [shape: f32[1,5120], index: 0, kind: input, shape index: {}]
  %s1 = inlined_call_operand.vmem [shape: f32[16,3], index: 1, kind: input, shape index: {}]
  %s2 = inlined_call_operand.hbm [shape: f32[16,5120], index: 2, kind: output, shape index: {}]
  %s3 = sld [smem:[#allocation0]]
  $region45: #{tpu_custom_call.1} parent=0
    _
  %s5 = ssub.s32 1, %s3
  %s6 = scalar_select 0, %s5, %s3
  $region1: #{tpu_custom_call.1} parent=0
    #allocation2 [shape = 'u8[20480]{0}', space=vmem, size = 0x5000, scoped, tag = 'input window, operand 0']
    #allocation3 [shape = 's32[2]{0}', space=sflag, size = 0x8, scoped, tag = 'scoped memory for tpu_custom_call.1']
    #allocation4 [shape = 's32[2]{0}', space=sflag, size = 0x8, scoped, tag = 'scoped memory for tpu_custom_call.1']
    #allocation5 [shape = 'u8[327680]{0}', space=vmem, size = 0x50000, scoped, tag = 'output window, operand 0']
    %7 = vsyncpa [#allocation3], 0
    %s8 = scalar_lea.sflag [#allocation3], 1
    %9 = vsyncpa %s8, 0
    %10 = vsyncpa [#allocation4], 0
    %s11 = scalar_lea.sflag [#allocation4], 1
    %12 = vsyncpa %s11, 0
    loop: start=0, step=1, limit=4
    $region2: #{tpu_custom_call.1} parent=1 // loop_pre_header
      _
    $region3: #{tpu_custom_call.1} parent=1 // loop_header
      %s14 = sphi 0, %s18
      %p15 = scmp.ge.s32.totalorder %s14, 4
      %s24 = sphi 0, %s26
      %s27 = sphi 0, %s24
      %s28 = sphi 0, %s27
      %s44 = sphi 0, %s28
      %s48 = sphi 0, %s48
      %s50 = sphi 0, %s48
      %s51 = sphi 0, %s50
      %s65 = sphi 0, %s51
      %s71 = sphi 0, %s73
      %s74 = sphi 0, %s71
      %s75 = sphi 0, %s74
      %s91 = sphi 0, %s75
    $region4: #{tpu_custom_call.1} parent=1 // loop_header_branch
      %17 = sbr.rel (%p15) target = $region8
    $region5: #{tpu_custom_call.1} parent=1 // loop_body
      %s19 = ssub.s32 %s14, 1
      %s20 = ssub.s32 %s14, 2
      %s21 = sadd.s32 %s14, 1
      %s22 = ssub.s32 %s14, %s21
      %p23 = scmp.eq.s32.totalorder %s22, 0
      %s25 = sadd.s32 %s24, 1
      %s26 = scalar_select %p23, %s24, %s25
      %p29 = pneg %p23
      %p30 = scmp.eq.s32.totalorder %s14, 1
      %p31 = por %p29, %p30
      %p32 = scmp.ne.s32.totalorder %s24, %s27
      %p33 = scmp.eq.s32.totalorder %s14, 0
      %p34 = por %p32, %p33
      %p35 = scmp.ne.s32.totalorder %s24, %s27
      %p36 = scmp.eq.s32.totalorder %s19, 1
      %p37 = por %p35, %p36
      %p38 = scmp.ne.s32.totalorder %s27, %s28
      %p39 = scmp.eq.s32.totalorder %s19, 0
      %p40 = por %p38, %p39
      %p41 = scmp.ne.s32.totalorder %s27, %s28
      %p42 = scmp.eq.s32.totalorder %s20, 1
      %p43 = por %p41, %p42
      %p45 = scmp.ne.s32.totalorder %s28, %s44
      %p46 = scmp.eq.s32.totalorder %s20, 0
      %p47 = por %p45, %p46
      %s49 = sadd.s32 %s48, 1
      %p52 = scmp.eq.s32.totalorder %s14, 1
      %p53 = scmp.ne.s32.totalorder %s48, %s50
      %p54 = scmp.eq.s32.totalorder %s14, 0
      %p55 = por %p53, %p54
      %p56 = scmp.ne.s32.totalorder %s48, %s50
      %p57 = scmp.eq.s32.totalorder %s19, 1
      %p58 = por %p56, %p57
      %p59 = scmp.ne.s32.totalorder %s50, %s51
      %p60 = scmp.eq.s32.totalorder %s19, 0
      %p61 = por %p59, %p60
      %p62 = scmp.ne.s32.totalorder %s50, %s51
      %p63 = scmp.eq.s32.totalorder %s20, 1
      %p64 = por %p62, %p63
      %p66 = scmp.ne.s32.totalorder %s51, %s65
      %p67 = scmp.eq.s32.totalorder %s20, 0
      %p68 = por %p66, %p67
      %s69 = ssub.s32 %s14, %s21
      %p70 = scmp.eq.s32.totalorder %s69, 0
      %s72 = sadd.s32 %s71, 1
      %s73 = scalar_select %p70, %s71, %s72
      %p76 = pneg %p70
      %p77 = scmp.eq.s32.totalorder %s14, 1
      %p78 = por %p76, %p77
      %p79 = scmp.ne.s32.totalorder %s71, %s74
      %p80 = scmp.eq.s32.totalorder %s14, 0
      %p81 = por %p79, %p80
      %p82 = scmp.ne.s32.totalorder %s71, %s74
      %p83 = scmp.eq.s32.totalorder %s19, 1
      %p84 = por %p82, %p83
      %p85 = scmp.ne.s32.totalorder %s74, %s75
      %p86 = scmp.eq.s32.totalorder %s19, 0
      %p87 = por %p85, %p86
      %p88 = scmp.ne.s32.totalorder %s74, %s75
      %p89 = scmp.eq.s32.totalorder %s20, 1
      %p90 = por %p88, %p89
      %p92 = scmp.ne.s32.totalorder %s75, %s91
      %p93 = scmp.eq.s32.totalorder %s20, 0
      %p94 = por %p92, %p93
      %p95 = scmp.le.s32.totalorder 1, %s14
      %p96 = scmp.lt.s32.totalorder %s14, 3
      %p97 = pnand %p95, %p96
      %p98 = pneg %p97
      // Predicated region
      $region9: #{tpu_custom_call.1} parent=5 // pred_check
        _
      $region10: #{tpu_custom_call.1} parent=5 // pred_check_branch
        %100 = sbr.rel (%p97) target = $region12
      $region11: #{tpu_custom_call.1} parent=5 // pred_region
        %s101 = ssub.s32 %s14, 1
        // Predicated region
        $region13: #{tpu_custom_call.1} parent=11 // pred_check
          %p102 = pneg %p61
        $region14: #{tpu_custom_call.1} parent=11 // pred_check_branch
          %104 = sbr.rel (%p102) target = $region16
        $region15: #{tpu_custom_call.1} parent=11 // pred_region
          _
        $region16: #{tpu_custom_call.1} parent=11 // pred_fallthru
          _
      $region12: #{tpu_custom_call.1} parent=5 // pred_fallthru
        _
      %p105 = scmp.lt.s32.totalorder %s14, 2
      // Predicated region
      $region17: #{tpu_custom_call.1} parent=5 // pred_check
        %p106 = pneg %p105
      $region18: #{tpu_custom_call.1} parent=5 // pred_check_branch
        %108 = sbr.rel (%p106) target = $region20
      $region19: #{tpu_custom_call.1} parent=5 // pred_region
        // Predicated region
        $region21: #{tpu_custom_call.1} parent=19 // pred_check
          %p109 = pneg %p34
        $region22: #{tpu_custom_call.1} parent=19 // pred_check_branch
          %111 = sbr.rel (%p109) target = $region24
        $region23: #{tpu_custom_call.1} parent=19 // pred_region
          %s112 = sand.u32 %s24, 1
          %s113 = scalar_lea.sflag [#allocation3], %s112
          %s114 = sand.u32 %s24, 1
          %s115 = smul.addr %s114, 20
          %s116 = scalar_lea.vmem [#allocation2], %s115
          %s117 = smul.u32 20, %s14
          %s119 = ssub.s32 320, 320
          %120 = vsyncadd %s113, %s119
          %s121 = smul.addr %s117, 16
          %s122 = scalar_lea.hbm %s0, %s121
          %s124 = sshll.u32 %s116, 4
          %s125 = int_to_ptr.vmem [resolvable:$true] %s124
          %127 = dma.hbm_to_vmem [thread:$0]  %s122, 320, %s125, %s113
        $region24: #{tpu_custom_call.1} parent=19 // pred_fallthru
          _
      $region20: #{tpu_custom_call.1} parent=5 // pred_fallthru
        _
      %p128 = scmp.le.s32.totalorder 1, %s14
      %p129 = scmp.lt.s32.totalorder %s14, 3
      %p130 = pnand %p128, %p129
      %p131 = pneg %p130
      // Predicated region
      $region25: #{tpu_custom_call.1} parent=5 // pred_check
        _
      $region26: #{tpu_custom_call.1} parent=5 // pred_check_branch
        %133 = sbr.rel (%p130) target = $region28
      $region27: #{tpu_custom_call.1} parent=5 // pred_region
        %s134 = ssub.s32 %s14, 1
        %s135 = sand.u32 %s27, 1
        %s136 = scalar_lea.sflag [#allocation3], %s135
        %s137 = sand.u32 %s27, 1
        %s138 = smul.addr %s137, 20
        %s139 = scalar_lea.vmem [#allocation2], %s138
        // Predicated region
        $region29: #{tpu_custom_call.1} parent=27 // pred_check
          %p140 = pneg %p40
        $region30: #{tpu_custom_call.1} parent=27 // pred_check_branch
          %142 = sbr.rel (%p140) target = $region32
        $region31: #{tpu_custom_call.1} parent=27 // pred_region
          %143 = dma.done %s136, 320
        $region32: #{tpu_custom_call.1} parent=27 // pred_fallthru
          _
        %s144 = sand.u32 %s27, 1
        %s145 = scalar_lea.sflag [#allocation3], %s144
        %s146 = sand.u32 %s27, 1
        %s147 = smul.addr %s146, 20
        %s148 = scalar_lea.vmem [#allocation2], %s147
        %p149 = pneg %p40
        %p150 = pneg %p37
        %p151 = pneg %p61
        %p152 = pneg %p58
        %p153 = pneg %p87
        %p154 = pneg %p84
        %s155 = sand.u32 %s74, 1
        %s156 = scalar_lea.sflag [#allocation4], %s155
        %s157 = sand.u32 %s74, 1
        %s158 = smul.addr %s157, 320
        %s159 = scalar_lea.vmem [#allocation5], %s158
        %s160 = smul.u32 20, %s19
        %s161 = smul.u32 20, %s19
        %v162 = vld [vmem:[%s139] sm:$0xff]
        %v163 = vld [vmem:[%s139 + $0x8] sm:$0xff]
        %v164 = vld [vmem:[%s139 + $0x10] sm:$0xf]
        %v165 = vsub.f32 %v162, 0.02
        %v166 = vsub.f32 %v163, 0.02
        %v167 = vsub.f32 %v164, 0.02
        %v168 = vmul.f32 %v165, 0.5050505
        %v169 = vmul.f32 %v166, 0.5050505
        %v170 = vmul.f32 %v167, 0.5050505
        %v171 = vld [vmem:[%s1] sm:$0xff]
        %v172 = vld [vmem:[%s1 + $0x8] sm:$0xff]
        %v176 = vlaneseq
        %v177 = vshrl.u32 %v176, 7
        %v178 = vsub.s32 0, %v177
        %v179 = vrot.slane %v168, %v178
        %v180 = vlaneseq
        %v181 = vshrl.u32 %v180, 7
        %v182 = vsub.s32 1, %v181
        %v183 = vrot.slane %v168, %v182
        %v184 = vlaneseq
        %v185 = vshrl.u32 %v184, 7
        %v186 = vsub.s32 2, %v185
        %v187 = vrot.slane %v168, %v186
        %v188 = vlaneseq
        %v189 = vshrl.u32 %v188, 7
        %v190 = vsub.s32 3, %v189
        %v191 = vrot.slane %v168, %v190
        %v192 = vlaneseq
        %v193 = vshrl.u32 %v192, 7
        %v194 = vsub.s32 4, %v193
        %v195 = vrot.slane %v168, %v194
        %v196 = vlaneseq
        %v197 = vshrl.u32 %v196, 7
        %v198 = vsub.s32 5, %v197
        %v199 = vrot.slane %v168, %v198
        %v200 = vlaneseq
        %v201 = vshrl.u32 %v200, 7
        %v202 = vsub.s32 6, %v201
        %v203 = vrot.slane %v168, %v202
        %v204 = vlaneseq
        %v205 = vshrl.u32 %v204, 7
        %v206 = vsub.s32 7, %v205
        %v207 = vrot.slane %v168, %v206
        %v208 = vlaneseq
        %v209 = vshrl.u32 %v208, 7
        %v210 = vsub.s32 0, %v209
        %v211 = vrot.slane %v169, %v210
        %v212 = vlaneseq
        %v213 = vshrl.u32 %v212, 7
        %v214 = vsub.s32 1, %v213
        %v215 = vrot.slane %v169, %v214
        %v216 = vlaneseq
        %v217 = vshrl.u32 %v216, 7
        %v218 = vsub.s32 2, %v217
        %v219 = vrot.slane %v169, %v218
        %v220 = vlaneseq
        %v221 = vshrl.u32 %v220, 7
        %v222 = vsub.s32 3, %v221
        %v223 = vrot.slane %v169, %v222
        %v224 = vlaneseq
        %v225 = vshrl.u32 %v224, 7
        %v226 = vsub.s32 4, %v225
        %v227 = vrot.slane %v169, %v226
        %v228 = vlaneseq
        %v229 = vshrl.u32 %v228, 7
        %v230 = vsub.s32 5, %v229
        %v231 = vrot.slane %v169, %v230
        %v232 = vlaneseq
        %v233 = vshrl.u32 %v232, 7
        %v234 = vsub.s32 6, %v233
        %v235 = vrot.slane %v169, %v234
        %v236 = vlaneseq
        %v237 = vshrl.u32 %v236, 7
        %v238 = vsub.s32 7, %v237
        %v239 = vrot.slane %v169, %v238
        %v240 = vlaneseq
        %v241 = vshrl.u32 %v240, 7
        %v242 = vsub.s32 0, %v241
        %v243 = vrot.slane %v170, %v242
        %v244 = vlaneseq
        %v245 = vshrl.u32 %v244, 7
        %v246 = vsub.s32 1, %v245
        %v247 = vrot.slane %v170, %v246
        %v248 = vlaneseq
        %v249 = vshrl.u32 %v248, 7
        %v250 = vsub.s32 2, %v249
        %v251 = vrot.slane %v170, %v250
        %v252 = vlaneseq
        %v253 = vshrl.u32 %v252, 7
        %v254 = vsub.s32 3, %v253
        %v255 = vrot.slane %v170, %v254
        %277 = vset.pattern.permute.xlu0 0
        %278 = vperm.xlu0 %277, %v171
        %v279 = vpop.permute.xlu0 %278
        %282 = vset.pattern.permute.xlu0 0
        %283 = vperm.xlu0 %282, %v172
        %v284 = vpop.permute.xlu0 %283
        %v286 = vsub.f32 %v179, %v279
        %v287 = vsub.f32 %v183, %v279
        %v288 = vsub.f32 %v187, %v279
        %v289 = vsub.f32 %v191, %v279
        %v290 = vsub.f32 %v195, %v279
        %v291 = vsub.f32 %v199, %v279
        %v292 = vsub.f32 %v203, %v279
        %v293 = vsub.f32 %v207, %v279
        %v294 = vsub.f32 %v211, %v279
        %v295 = vsub.f32 %v215, %v279
        %v296 = vsub.f32 %v219, %v279
        %v297 = vsub.f32 %v223, %v279
        %v298 = vsub.f32 %v227, %v279
        %v299 = vsub.f32 %v231, %v279
        %v300 = vsub.f32 %v235, %v279
        %v301 = vsub.f32 %v239, %v279
        %v302 = vsub.f32 %v243, %v279
        %v303 = vsub.f32 %v247, %v279
        %v304 = vsub.f32 %v251, %v279
        %v305 = vsub.f32 %v255, %v279
        %v306 = vsub.f32 %v179, %v284
        %v307 = vsub.f32 %v183, %v284
        %v308 = vsub.f32 %v187, %v284
        %v309 = vsub.f32 %v191, %v284
        %v310 = vsub.f32 %v195, %v284
        %v311 = vsub.f32 %v199, %v284
        %v312 = vsub.f32 %v203, %v284
        %v313 = vsub.f32 %v207, %v284
        %v314 = vsub.f32 %v211, %v284
        %v315 = vsub.f32 %v215, %v284
        %v316 = vsub.f32 %v219, %v284
        %v317 = vsub.f32 %v223, %v284
        %v318 = vsub.f32 %v227, %v284
        %v319 = vsub.f32 %v231, %v284
        %v320 = vsub.f32 %v235, %v284
        %v321 = vsub.f32 %v239, %v284
        %v322 = vsub.f32 %v243, %v284
        %v323 = vsub.f32 %v247, %v284
        %v324 = vsub.f32 %v251, %v284
        %v325 = vsub.f32 %v255, %v284
        %v326 = vmul.f32 %v286, %v286
        %v327 = vmul.f32 %v287, %v287
        %v328 = vmul.f32 %v288, %v288
        %v329 = vmul.f32 %v289, %v289
        %v330 = vmul.f32 %v290, %v290
        %v331 = vmul.f32 %v291, %v291
        %v332 = vmul.f32 %v292, %v292
        %v333 = vmul.f32 %v293, %v293
        %v334 = vmul.f32 %v294, %v294
        %v335 = vmul.f32 %v295, %v295
        %v336 = vmul.f32 %v296, %v296
        %v337 = vmul.f32 %v297, %v297
        %v338 = vmul.f32 %v298, %v298
        %v339 = vmul.f32 %v299, %v299
        %v340 = vmul.f32 %v300, %v300
        %v341 = vmul.f32 %v301, %v301
        %v342 = vmul.f32 %v302, %v302
        %v343 = vmul.f32 %v303, %v303
        %v344 = vmul.f32 %v304, %v304
        %v345 = vmul.f32 %v305, %v305
        %v346 = vmul.f32 %v306, %v306
        %v347 = vmul.f32 %v307, %v307
        %v348 = vmul.f32 %v308, %v308
        %v349 = vmul.f32 %v309, %v309
        %v350 = vmul.f32 %v310, %v310
        %v351 = vmul.f32 %v311, %v311
        %v352 = vmul.f32 %v312, %v312
        %v353 = vmul.f32 %v313, %v313
        %v354 = vmul.f32 %v314, %v314
        %v355 = vmul.f32 %v315, %v315
        %v356 = vmul.f32 %v316, %v316
        %v357 = vmul.f32 %v317, %v317
        %v358 = vmul.f32 %v318, %v318
        %v359 = vmul.f32 %v319, %v319
        %v360 = vmul.f32 %v320, %v320
        %v361 = vmul.f32 %v321, %v321
        %v362 = vmul.f32 %v322, %v322
        %v363 = vmul.f32 %v323, %v323
        %v364 = vmul.f32 %v324, %v324
        %v365 = vmul.f32 %v325, %v325
        %366 = vset.pattern.permute.xlu0 1
        %367 = vperm.xlu0 %366, %v171
        %v368 = vpop.permute.xlu0 %367
        %370 = vset.pattern.permute.xlu0 1
        %371 = vperm.xlu0 %370, %v172
        %v372 = vpop.permute.xlu0 %371
        %v374 = vmul.f32 %v368, %v326
        %v375 = vmul.f32 %v368, %v327
        %v376 = vmul.f32 %v368, %v328
        %v377 = vmul.f32 %v368, %v329
        %v378 = vmul.f32 %v368, %v330
        %v379 = vmul.f32 %v368, %v331
        %v380 = vmul.f32 %v368, %v332
        %v381 = vmul.f32 %v368, %v333
        %v382 = vmul.f32 %v368, %v334
        %v383 = vmul.f32 %v368, %v335
        %v384 = vmul.f32 %v368, %v336
        %v385 = vmul.f32 %v368, %v337
        %v386 = vmul.f32 %v368, %v338
        %v387 = vmul.f32 %v368, %v339
        %v388 = vmul.f32 %v368, %v340
        %v389 = vmul.f32 %v368, %v341
        %v390 = vmul.f32 %v368, %v342
        %v391 = vmul.f32 %v368, %v343
        %v392 = vmul.f32 %v368, %v344
        %v393 = vmul.f32 %v368, %v345
        %v394 = vmul.f32 %v372, %v346
        %v395 = vmul.f32 %v372, %v347
        %v396 = vmul.f32 %v372, %v348
        %v397 = vmul.f32 %v372, %v349
        %v398 = vmul.f32 %v372, %v350
        %v399 = vmul.f32 %v372, %v351
        %v400 = vmul.f32 %v372, %v352
        %v401 = vmul.f32 %v372, %v353
        %v402 = vmul.f32 %v372, %v354
        %v403 = vmul.f32 %v372, %v355
        %v404 = vmul.f32 %v372, %v356
        %v405 = vmul.f32 %v372, %v357
        %v406 = vmul.f32 %v372, %v358
        %v407 = vmul.f32 %v372, %v359
        %v408 = vmul.f32 %v372, %v360
        %v409 = vmul.f32 %v372, %v361
        %v410 = vmul.f32 %v372, %v362
        %v411 = vmul.f32 %v372, %v363
        %v412 = vmul.f32 %v372, %v364
        %v413 = vmul.f32 %v372, %v365
        %v414 = vmul.f32 %v374, 1.442695
        %v415 = vpow.pop %v414
        %v416 = vmul.f32 %v375, 1.442695
        %v417 = vpow.pop %v416
        %v418 = vmul.f32 %v376, 1.442695
        %v419 = vpow.pop %v418
        %v420 = vmul.f32 %v377, 1.442695
        %v421 = vpow.pop %v420
        %v422 = vmul.f32 %v378, 1.442695
        %v423 = vpow.pop %v422
        %v424 = vmul.f32 %v379, 1.442695
        %v425 = vpow.pop %v424
        %v426 = vmul.f32 %v380, 1.442695
        %v427 = vpow.pop %v426
        %v428 = vmul.f32 %v381, 1.442695
        %v429 = vpow.pop %v428
        %v430 = vmul.f32 %v382, 1.442695
        %v431 = vpow.pop %v430
        %v432 = vmul.f32 %v383, 1.442695
        %v433 = vpow.pop %v432
        %v434 = vmul.f32 %v384, 1.442695
        %v435 = vpow.pop %v434
        %v436 = vmul.f32 %v385, 1.442695
        %v437 = vpow.pop %v436
        %v438 = vmul.f32 %v386, 1.442695
        %v439 = vpow.pop %v438
        %v440 = vmul.f32 %v387, 1.442695
        %v441 = vpow.pop %v440
        %v442 = vmul.f32 %v388, 1.442695
        %v443 = vpow.pop %v442
        %v444 = vmul.f32 %v389, 1.442695
        %v445 = vpow.pop %v444
        %v446 = vmul.f32 %v390, 1.442695
        %v447 = vpow.pop %v446
        %v448 = vmul.f32 %v391, 1.442695
        %v449 = vpow.pop %v448
        %v450 = vmul.f32 %v392, 1.442695
        %v451 = vpow.pop %v450
        %v452 = vmul.f32 %v393, 1.442695
        %v453 = vpow.pop %v452
        %v454 = vmul.f32 %v394, 1.442695
        %v455 = vpow.pop %v454
        %v456 = vmul.f32 %v395, 1.442695
        %v457 = vpow.pop %v456
        %v458 = vmul.f32 %v396, 1.442695
        %v459 = vpow.pop %v458
        %v460 = vmul.f32 %v397, 1.442695
        %v461 = vpow.pop %v460
        %v462 = vmul.f32 %v398, 1.442695
        %v463 = vpow.pop %v462
        %v464 = vmul.f32 %v399, 1.442695
        %v465 = vpow.pop %v464
        %v466 = vmul.f32 %v400, 1.442695
        %v467 = vpow.pop %v466
        %v468 = vmul.f32 %v401, 1.442695
        %v469 = vpow.pop %v468
        %v470 = vmul.f32 %v402, 1.442695
        %v471 = vpow.pop %v470
        %v472 = vmul.f32 %v403, 1.442695
        %v473 = vpow.pop %v472
        %v474 = vmul.f32 %v404, 1.442695
        %v475 = vpow.pop %v474
        %v476 = vmul.f32 %v405, 1.442695
        %v477 = vpow.pop %v476
        %v478 = vmul.f32 %v406, 1.442695
        %v479 = vpow.pop %v478
        %v480 = vmul.f32 %v407, 1.442695
        %v481 = vpow.pop %v480
        %v482 = vmul.f32 %v408, 1.442695
        %v483 = vpow.pop %v482
        %v484 = vmul.f32 %v409, 1.442695
        %v485 = vpow.pop %v484
        %v486 = vmul.f32 %v410, 1.442695
        %v487 = vpow.pop %v486
        %v488 = vmul.f32 %v411, 1.442695
        %v489 = vpow.pop %v488
        %v490 = vmul.f32 %v412, 1.442695
        %v491 = vpow.pop %v490
        %v492 = vmul.f32 %v413, 1.442695
        %v493 = vpow.pop %v492
        %494 = vset.pattern.permute.xlu0 2
        %495 = vperm.xlu0 %494, %v171
        %v496 = vpop.permute.xlu0 %495
        %498 = vset.pattern.permute.xlu0 2
        %499 = vperm.xlu0 %498, %v172
        %v500 = vpop.permute.xlu0 %499
        %v502 = vmul.f32 %v496, %v415
        %v503 = vmul.f32 %v496, %v417
        %v504 = vmul.f32 %v496, %v419
        %v505 = vmul.f32 %v496, %v421
        %v506 = vmul.f32 %v496, %v423
        %v507 = vmul.f32 %v496, %v425
        %v508 = vmul.f32 %v496, %v427
        %v509 = vmul.f32 %v496, %v429
        %v510 = vmul.f32 %v496, %v431
        %v511 = vmul.f32 %v496, %v433
        %v512 = vmul.f32 %v496, %v435
        %v513 = vmul.f32 %v496, %v437
        %v514 = vmul.f32 %v496, %v439
        %v515 = vmul.f32 %v496, %v441
        %v516 = vmul.f32 %v496, %v443
        %v517 = vmul.f32 %v496, %v445
        %v518 = vmul.f32 %v496, %v447
        %v519 = vmul.f32 %v496, %v449
        %v520 = vmul.f32 %v496, %v451
        %v521 = vmul.f32 %v496, %v453
        %v522 = vmul.f32 %v500, %v455
        %v523 = vmul.f32 %v500, %v457
        %v524 = vmul.f32 %v500, %v459
        %v525 = vmul.f32 %v500, %v461
        %v526 = vmul.f32 %v500, %v463
        %v527 = vmul.f32 %v500, %v465
        %v528 = vmul.f32 %v500, %v467
        %v529 = vmul.f32 %v500, %v469
        %v530 = vmul.f32 %v500, %v471
        %v531 = vmul.f32 %v500, %v473
        %v532 = vmul.f32 %v500, %v475
        %v533 = vmul.f32 %v500, %v477
        %v534 = vmul.f32 %v500, %v479
        %v535 = vmul.f32 %v500, %v481
        %v536 = vmul.f32 %v500, %v483
        %v537 = vmul.f32 %v500, %v485
        %v538 = vmul.f32 %v500, %v487
        %v539 = vmul.f32 %v500, %v489
        %v540 = vmul.f32 %v500, %v491
        %v541 = vmul.f32 %v500, %v493
        %v542 = vsub.f32 1.0, %v168
        %v543 = vsub.f32 1.0, %v169
        %v544 = vsub.f32 1.0, %v170
        %v545 = vsub.f32 %v542, 0.8
        %v546 = vsub.f32 %v543, 0.8
        %v547 = vsub.f32 %v544, 0.8
        %v548 = vmul.f32 %v545, 5.0
        %v549 = vmul.f32 %v546, 5.0
        %v550 = vmul.f32 %v547, 5.0
        %v551 = vmul.f32 %v548, %v548
        %v552 = vmul.f32 %v549, %v549
        %v553 = vmul.f32 %v550, %v550
        %v554 = vmul.f32 %v551, %v548
        %v555 = vmul.f32 %v552, %v549
        %v556 = vmul.f32 %v553, %v550
        %v557 = vmul.f32 %v548, 3.0
        %v558 = vmul.f32 %v549, 3.0
        %v559 = vmul.f32 %v550, 3.0
        %v560 = vsub.f32 4.0, %v557
        %v561 = vsub.f32 4.0, %v558
        %v562 = vsub.f32 4.0, %v559
        %v563 = vmul.f32 %v554, %v560
        %v564 = vmul.f32 %v555, %v561
        %v565 = vmul.f32 %v556, %v562
        %vm566 = vcmp.le.f32.partialorder %v548, 0.0
        %vm567 = vcmp.le.f32.partialorder %v549, 0.0
        %vm568 = vcmp.le.f32.partialorder %v550, 0.0
        %vm569 = vcmp.ge.f32.partialorder %v548, 1.0
        %vm570 = vcmp.ge.f32.partialorder %v549, 1.0
        %vm571 = vcmp.ge.f32.partialorder %v550, 1.0
        %v572 = vsel %vm569, 1.0, %v563
        %v573 = vsel %vm570, 1.0, %v564
        %v574 = vsel %vm571, 1.0, %v565
        %v575 = vsel %vm566, 0.0, %v572
        %v576 = vsel %vm567, 0.0, %v573
        %v577 = vsel %vm568, 0.0, %v574
        %v578 = vsub.f32 1.0, %v575
        %v579 = vsub.f32 1.0, %v576
        %v580 = vsub.f32 1.0, %v577
        %vm581 = vcmp.le.f32.partialorder %v168, 0.5
        %vm582 = vcmp.le.f32.partialorder %v169, 0.5
        %vm583 = vcmp.le.f32.partialorder %v170, 0.5
        %v584 = vsel %vm581, %v578, 1.0
        %v585 = vsel %vm582, %v579, 1.0
        %v586 = vsel %vm583, %v580, 1.0
        %v590 = vlaneseq
        %v591 = vshrl.u32 %v590, 7
        %v592 = vsub.s32 0, %v591
        %v593 = vrot.slane %v584, %v592
        %v594 = vlaneseq
        %v595 = vshrl.u32 %v594, 7
        %v596 = vsub.s32 1, %v595
        %v597 = vrot.slane %v584, %v596
        %v598 = vlaneseq
        %v599 = vshrl.u32 %v598, 7
        %v600 = vsub.s32 2, %v599
        %v601 = vrot.slane %v584, %v600
        %v602 = vlaneseq
        %v603 = vshrl.u32 %v602, 7
        %v604 = vsub.s32 3, %v603
        %v605 = vrot.slane %v584, %v604
        %v606 = vlaneseq
        %v607 = vshrl.u32 %v606, 7
        %v608 = vsub.s32 4, %v607
        %v609 = vrot.slane %v584, %v608
        %v610 = vlaneseq
        %v611 = vshrl.u32 %v610, 7
        %v612 = vsub.s32 5, %v611
        %v613 = vrot.slane %v584, %v612
        %v614 = vlaneseq
        %v615 = vshrl.u32 %v614, 7
        %v616 = vsub.s32 6, %v615
        %v617 = vrot.slane %v584, %v616
        %v618 = vlaneseq
        %v619 = vshrl.u32 %v618, 7
        %v620 = vsub.s32 7, %v619
        %v621 = vrot.slane %v584, %v620
        %v622 = vlaneseq
        %v623 = vshrl.u32 %v622, 7
        %v624 = vsub.s32 0, %v623
        %v625 = vrot.slane %v585, %v624
        %v626 = vlaneseq
        %v627 = vshrl.u32 %v626, 7
        %v628 = vsub.s32 1, %v627
        %v629 = vrot.slane %v585, %v628
        %v630 = vlaneseq
        %v631 = vshrl.u32 %v630, 7
        %v632 = vsub.s32 2, %v631
        %v633 = vrot.slane %v585, %v632
        %v634 = vlaneseq
        %v635 = vshrl.u32 %v634, 7
        %v636 = vsub.s32 3, %v635
        %v637 = vrot.slane %v585, %v636
        %v638 = vlaneseq
        %v639 = vshrl.u32 %v638, 7
        %v640 = vsub.s32 4, %v639
        %v641 = vrot.slane %v585, %v640
        %v642 = vlaneseq
        %v643 = vshrl.u32 %v642, 7
        %v644 = vsub.s32 5, %v643
        %v645 = vrot.slane %v585, %v644
        %v646 = vlaneseq
        %v647 = vshrl.u32 %v646, 7
        %v648 = vsub.s32 6, %v647
        %v649 = vrot.slane %v585, %v648
        %v650 = vlaneseq
        %v651 = vshrl.u32 %v650, 7
        %v652 = vsub.s32 7, %v651
        %v653 = vrot.slane %v585, %v652
        %v654 = vlaneseq
        %v655 = vshrl.u32 %v654, 7
        %v656 = vsub.s32 0, %v655
        %v657 = vrot.slane %v586, %v656
        %v658 = vlaneseq
        %v659 = vshrl.u32 %v658, 7
        %v660 = vsub.s32 1, %v659
        %v661 = vrot.slane %v586, %v660
        %v662 = vlaneseq
        %v663 = vshrl.u32 %v662, 7
        %v664 = vsub.s32 2, %v663
        %v665 = vrot.slane %v586, %v664
        %v666 = vlaneseq
        %v667 = vshrl.u32 %v666, 7
        %v668 = vsub.s32 3, %v667
        %v669 = vrot.slane %v586, %v668
        %v690 = vmul.f32 %v502, %v593
        %v691 = vmul.f32 %v503, %v597
        %v692 = vmul.f32 %v504, %v601
        %v693 = vmul.f32 %v505, %v605
        %v694 = vmul.f32 %v506, %v609
        %v695 = vmul.f32 %v507, %v613
        %v696 = vmul.f32 %v508, %v617
        %v697 = vmul.f32 %v509, %v621
        %v698 = vmul.f32 %v510, %v625
        %v699 = vmul.f32 %v511, %v629
        %v700 = vmul.f32 %v512, %v633
        %v701 = vmul.f32 %v513, %v637
        %v702 = vmul.f32 %v514, %v641
        %v703 = vmul.f32 %v515, %v645
        %v704 = vmul.f32 %v516, %v649
        %v705 = vmul.f32 %v517, %v653
        %v706 = vmul.f32 %v518, %v657
        %v707 = vmul.f32 %v519, %v661
        %v708 = vmul.f32 %v520, %v665
        %v709 = vmul.f32 %v521, %v669
        %v710 = vmul.f32 %v522, %v593
        %v711 = vmul.f32 %v523, %v597
        %v712 = vmul.f32 %v524, %v601
        %v713 = vmul.f32 %v525, %v605
        %v714 = vmul.f32 %v526, %v609
        %v715 = vmul.f32 %v527, %v613
        %v716 = vmul.f32 %v528, %v617
        %v717 = vmul.f32 %v529, %v621
        %v718 = vmul.f32 %v530, %v625
        %v719 = vmul.f32 %v531, %v629
        %v720 = vmul.f32 %v532, %v633
        %v721 = vmul.f32 %v533, %v637
        %v722 = vmul.f32 %v534, %v641
        %v723 = vmul.f32 %v535, %v645
        %v724 = vmul.f32 %v536, %v649
        %v725 = vmul.f32 %v537, %v653
        %v726 = vmul.f32 %v538, %v657
        %v727 = vmul.f32 %v539, %v661
        %v728 = vmul.f32 %v540, %v665
        %v729 = vmul.f32 %v541, %v669
        %730 = vst [vmem:[%s159] sm:$0xff] %v690
        %731 = vst [vmem:[%s159 + $0x8] sm:$0xff] %v691
        %732 = vst [vmem:[%s159 + $0x10] sm:$0xff] %v692
        %733 = vst [vmem:[%s159 + $0x18] sm:$0xff] %v693
        %734 = vst [vmem:[%s159 + $0x20] sm:$0xff] %v694
        %735 = vst [vmem:[%s159 + $0x28] sm:$0xff] %v695
        %736 = vst [vmem:[%s159 + $0x30] sm:$0xff] %v696
        %737 = vst [vmem:[%s159 + $0x38] sm:$0xff] %v697
        %738 = vst [vmem:[%s159 + $0x40] sm:$0xff] %v698
        %739 = vst [vmem:[%s159 + $0x48] sm:$0xff] %v699
        %740 = vst [vmem:[%s159 + $0x50] sm:$0xff] %v700
        %741 = vst [vmem:[%s159 + $0x58] sm:$0xff] %v701
        %742 = vst [vmem:[%s159 + $0x60] sm:$0xff] %v702
        %743 = vst [vmem:[%s159 + $0x68] sm:$0xff] %v703
        %744 = vst [vmem:[%s159 + $0x70] sm:$0xff] %v704
        %745 = vst [vmem:[%s159 + $0x78] sm:$0xff] %v705
        %746 = vst [vmem:[%s159 + $0x80] sm:$0xff] %v706
        %747 = vst [vmem:[%s159 + $0x88] sm:$0xff] %v707
        %748 = vst [vmem:[%s159 + $0x90] sm:$0xff] %v708
        %749 = vst [vmem:[%s159 + $0x98] sm:$0xff] %v709
        %750 = vst [vmem:[%s159 + $0xa0] sm:$0xff] %v710
        %751 = vst [vmem:[%s159 + $0xa8] sm:$0xff] %v711
        %752 = vst [vmem:[%s159 + $0xb0] sm:$0xff] %v712
        %753 = vst [vmem:[%s159 + $0xb8] sm:$0xff] %v713
        %754 = vst [vmem:[%s159 + $0xc0] sm:$0xff] %v714
        %755 = vst [vmem:[%s159 + $0xc8] sm:$0xff] %v715
        %756 = vst [vmem:[%s159 + $0xd0] sm:$0xff] %v716
        %757 = vst [vmem:[%s159 + $0xd8] sm:$0xff] %v717
        %758 = vst [vmem:[%s159 + $0xe0] sm:$0xff] %v718
        %759 = vst [vmem:[%s159 + $0xe8] sm:$0xff] %v719
        %760 = vst [vmem:[%s159 + $0xf0] sm:$0xff] %v720
        %761 = vst [vmem:[%s159 + $0xf8] sm:$0xff] %v721
        %762 = vst [vmem:[%s159 + $0x100] sm:$0xff] %v722
        %763 = vst [vmem:[%s159 + $0x108] sm:$0xff] %v723
        %764 = vst [vmem:[%s159 + $0x110] sm:$0xff] %v724
        %765 = vst [vmem:[%s159 + $0x118] sm:$0xff] %v725
        %766 = vst [vmem:[%s159 + $0x120] sm:$0xff] %v726
        %767 = vst [vmem:[%s159 + $0x128] sm:$0xff] %v727
        %768 = vst [vmem:[%s159 + $0x130] sm:$0xff] %v728
        %769 = vst [vmem:[%s159 + $0x138] sm:$0xff] %v729
        %s770 = sand.u32 %s74, 1
        %s771 = scalar_lea.sflag [#allocation4], %s770
        %s772 = sand.u32 %s74, 1
        %s773 = smul.addr %s772, 320
        %s774 = scalar_lea.vmem [#allocation5], %s773
        // Predicated region
        $region33: #{tpu_custom_call.1} parent=27 // pred_check
          %p775 = pneg %p84
        $region34: #{tpu_custom_call.1} parent=27 // pred_check_branch
          %777 = sbr.rel (%p775) target = $region36
        $region35: #{tpu_custom_call.1} parent=27 // pred_region
          %s778 = smul.u32 20, %s19
          %s780 = ssub.s32 5120, 5120
          %781 = vsyncadd %s771, %s780
          %s782 = smul.addr %s778, 128
          %s783 = scalar_lea.hbm %s2, %s782
          %s784 = sshll.u32 %s774, 4
          %s785 = int_to_ptr.vmem [resolvable:$true] %s784
          %790 = dma.vmem_to_hbm [thread:$0]  %s785, 5120, %s783, %s771, 2560, 5120, 160
        $region36: #{tpu_custom_call.1} parent=27 // pred_fallthru
          _
      $region28: #{tpu_custom_call.1} parent=5 // pred_fallthru
        _
      %p791 = scmp.le.s32.totalorder 2, %s14
      // Predicated region
      $region37: #{tpu_custom_call.1} parent=5 // pred_check
        %p792 = pneg %p791
      $region38: #{tpu_custom_call.1} parent=5 // pred_check_branch
        %794 = sbr.rel (%p792) target = $region40
      $region39: #{tpu_custom_call.1} parent=5 // pred_region
        %s795 = ssub.s32 %s14, 2
        // Predicated region
        $region41: #{tpu_custom_call.1} parent=39 // pred_check
          %p796 = pneg %p90
        $region42: #{tpu_custom_call.1} parent=39 // pred_check_branch
          %798 = sbr.rel (%p796) target = $region44
        $region43: #{tpu_custom_call.1} parent=39 // pred_region
          %s799 = sand.u32 %s75, 1
          %s800 = scalar_lea.sflag [#allocation4], %s799
          %s801 = sand.u32 %s75, 1
          %s802 = smul.addr %s801, 320
          %s803 = scalar_lea.vmem [#allocation5], %s802
          %804 = dma.done %s800, 5120
        $region44: #{tpu_custom_call.1} parent=39 // pred_fallthru
          _
      $region40: #{tpu_custom_call.1} parent=5 // pred_fallthru
        _
    $region6: #{tpu_custom_call.1} parent=1 // loop_footer
      %s18 = sadd.s32 1, %s14
    $region7: #{tpu_custom_call.1} parent=1 // loop_footer_branch
      %13 = sbr.rel target = $region3
    $region8: #{tpu_custom_call.1} parent=1 // loop_exit
      _
    %805 = vsyncpa [#allocation3], 1
    %s806 = scalar_lea.sflag [#allocation3], 1
    %807 = vsyncpa %s806, 1
    %808 = vsyncpa [#allocation4], 1
    %s809 = scalar_lea.sflag [#allocation4], 1
    %810 = vsyncpa %s809, 1

</llo_original>
